<compile_context>
chip_gen: v7x
topology: tpu7x:2x2x1
jax: 0.10.0
libtpu: 0.0.40
codegen_flags: <defaults>
</compile_context>

<pallas_src>
import jax
import jax.numpy as jnp
from jax.experimental import pallas as pl
from jax.experimental.pallas import tpu as pltpu

EPS = 1e-5


def _make_kernel(R, W, Cin, Cmid, Cout):
    def bn_relu(h, mask, p, g_row, b_row):
        # h: [R, W*C] f32 with halo/pad rows already zeroed, so they drop out
        # of the sums; p folds the reduce-over-w, the re-tile and 1/count.
        s = jnp.sum(h, axis=0, keepdims=True)                  # [1, W*C]
        q = jnp.sum(h * h, axis=0, keepdims=True)              # [1, W*C]
        sq = jnp.concatenate([s, q], axis=0)                   # [2, W*C]
        stats = jnp.dot(sq, p, preferred_element_type=jnp.float32)
        mean_t = stats[0:1, :]                                 # E[x]  per lane
        ex2_t = stats[1:2, :]                                  # E[x^2] per lane
        var_t = jnp.maximum(ex2_t - mean_t * mean_t, 0.0)
        scale = jax.lax.rsqrt(var_t + EPS) * g_row
        shift = b_row - mean_t * scale
        # ReLU + re-zero halo/pad rows (shift is nonzero there otherwise)
        return jnp.maximum(h * scale + shift, 0.0) * mask

    def conv3(lhs_bf16, w_ref):
        # h[r] = x[r-1]@W0 + x[r]@W1 + x[r+1]@W2, realized as three dots of the
        # SAME aligned LHS followed by output rolls (wrapped rows are masked or
        # all-zero by construction).
        y0 = jnp.dot(lhs_bf16, w_ref[0], preferred_element_type=jnp.float32)
        y1 = jnp.dot(lhs_bf16, w_ref[1], preferred_element_type=jnp.float32)
        y2 = jnp.dot(lhs_bf16, w_ref[2], preferred_element_type=jnp.float32)
        return (pltpu.roll(y0, shift=1, axis=0) + y1
                + pltpu.roll(y2, shift=R - 1, axis=0))

    def kernel(xp_ref, w1_ref, w2_ref, p1_ref, p2_ref,
               g1_ref, b1_ref, g2_ref, b2_ref, mask_ref, out_ref):
        mask = mask_ref[...]                                   # [R, 1] f32
        xp = xp_ref[...]                                       # [R, W*Cin] bf16

        h1 = conv3(xp, w1_ref) * mask
        a1 = bn_relu(h1, mask, p1_ref[...], g1_ref[...], b1_ref[...])

        h2 = conv3(a1.astype(jnp.bfloat16), w2_ref) * mask
        out_ref[...] = bn_relu(h2, mask, p2_ref[...], g2_ref[...], b2_ref[...])

    return kernel


def double_conv(x_nchw, w1, w2, g1, b1, g2, b2):
    """x_nchw: [N, Cin, H, W]; w1: [Cmid, Cin, 3, 1]; w2: [Cout, Cmid, 3, 1]."""
    N, Cin, H, W = x_nchw.shape
    Cmid = w1.shape[0]
    Cout = w2.shape[0]
    HP = H + 2                       # per-image rows incl. 1-row halo top/bot
    R0 = N * HP
    R = ((R0 + 7) // 8) * 8          # sublane-aligned row count

    # layout plumbing: NCHW -> per-image H-padded rows, lane-dense (w, c) cols,
    # cast to bf16 ONCE here (matmul operands are bf16 anyway).
    x_nhwc = jnp.transpose(x_nchw, (0, 2, 3, 1)).astype(jnp.float32)
    xp = jnp.pad(x_nhwc, ((0, 0), (1, 1), (0, 0), (0, 0))).reshape(R0, W * Cin)
    xp = jnp.pad(xp, ((0, R - R0), (0, 0))).astype(jnp.bfloat16)

    # block-diagonal conv weights: lane index l = w*C + c
    eye_w = jnp.eye(W, dtype=jnp.float32)
    w1_bd = jnp.stack([jnp.kron(eye_w, w1[:, :, kh, 0].T) for kh in range(3)]
                      ).astype(jnp.bfloat16)                  # [3, W*Cin, W*Cmid]
    w2_bd = jnp.stack([jnp.kron(eye_w, w2[:, :, kh, 0].T) for kh in range(3)]
                      ).astype(jnp.bfloat16)                  # [3, W*Cmid, W*Cout]

    # per-channel reduce-over-w + re-tile matrices, with 1/count folded in
    inv_cnt = 1.0 / float(N * H * W)
    ones_w = jnp.ones((W, W), jnp.float32)
    p1 = jnp.kron(ones_w, jnp.eye(Cmid, dtype=jnp.float32)) * inv_cnt
    p2 = jnp.kron(ones_w, jnp.eye(Cout, dtype=jnp.float32)) * inv_cnt

    # gamma/beta tiled to the (w, c) lane layout
    g1_t = jnp.tile(g1.astype(jnp.float32).reshape(1, Cmid), (1, W))
    b1_t = jnp.tile(b1.astype(jnp.float32).reshape(1, Cmid), (1, W))
    g2_t = jnp.tile(g2.astype(jnp.float32).reshape(1, Cout), (1, W))
    b2_t = jnp.tile(b2.astype(jnp.float32).reshape(1, Cout), (1, W))

    # validity mask: 0 on per-image conv-halo rows and on the alignment pad rows
    rows = jnp.arange(R, dtype=jnp.int32)
    hp_idx = rows % HP
    mask = ((rows < R0) & (hp_idx >= 1) & (hp_idx <= H)
            ).astype(jnp.float32).reshape(R, 1)

    kernel = _make_kernel(R, W, Cin, Cmid, Cout)
    out_flat = pl.pallas_call(
        kernel,
        out_shape=jax.ShapeDtypeStruct((R, W * Cout), jnp.float32),
        in_specs=[pl.BlockSpec(memory_space=pltpu.MemorySpace.VMEM)] * 10,
        out_specs=pl.BlockSpec(memory_space=pltpu.MemorySpace.VMEM),
    )(xp, w1_bd, w2_bd, p1, p2, g1_t, b1_t, g2_t, b2_t, mask)

    out = out_flat[:R0].reshape(N, HP, W, Cout)[:, 1:H + 1]   # drop halo rows
    return jnp.transpose(out, (0, 3, 1, 2))                   # back to NCHW


def reference(x, w1, w2, g1, b1, g2, b2):
    """Pure-JAX reference mirroring the PyTorch forward (training-mode BN)."""
    def conv(v, w):
        return jax.lax.conv_general_dilated(
            v, w, window_strides=(1, 1), padding=((1, 1), (0, 0)),
            dimension_numbers=('NCHW', 'OIHW', 'NCHW'))

    def bn_relu(v, g, b):
        mean = jnp.mean(v, axis=(0, 2, 3), keepdims=True)
        var = jnp.mean((v - mean) ** 2, axis=(0, 2, 3), keepdims=True)
        y = (v - mean) * jax.lax.rsqrt(var + EPS)
        y = y * g.reshape(1, -1, 1, 1) + b.reshape(1, -1, 1, 1)
        return jnp.maximum(y, 0.0)

    h = bn_relu(conv(x, w1), g1, b1)
    return bn_relu(conv(h, w2), g2, b2)


if __name__ == "__main__":
    key = jax.random.PRNGKey(0)
    kx, k1, k2, kg1, kb1, kg2, kb2 = jax.random.split(key, 7)

    N, Cin, H, W = 2, 4, 16, 16
    Cmid = Cout = 8

    x = jax.random.normal(kx, (N, Cin, H, W), jnp.float32)
    w1 = 0.3 * jax.random.normal(k1, (Cmid, Cin, 3, 1), jnp.float32)
    w2 = 0.3 * jax.random.normal(k2, (Cout, Cmid, 3, 1), jnp.float32)
    g1 = 1.0 + 0.1 * jax.random.normal(kg1, (Cmid,), jnp.float32)
    b1 = 0.1 * jax.random.normal(kb1, (Cmid,), jnp.float32)
    g2 = 1.0 + 0.1 * jax.random.normal(kg2, (Cout,), jnp.float32)
    b2 = 0.1 * jax.random.normal(kb2, (Cout,), jnp.float32)

    out = jax.block_until_ready(double_conv(x, w1, w2, g1, b1, g2, b2))
    assert out.shape == (N, Cout, H, W)

    ref = jax.block_until_ready(reference(x, w1, w2, g1, b1, g2, b2))
    max_err = float(jnp.max(jnp.abs(out - ref)))
    # bf16 matmul operands (f32 accumulation) -> slightly looser tolerance
    assert max_err < 5e-2, f"mismatch vs reference: {max_err}"

    print("KERNEL_OK")
</pallas_src>

<mosaic_0001>
module attributes {stable_mosaic.version = 11 : i64} {
  func.func @kernel(%arg0: memref<40x64xbf16, #tpu.memory_space<vmem>>, %arg1: memref<3x64x128xbf16, #tpu.memory_space<vmem>>, %arg2: memref<3x128x128xbf16, #tpu.memory_space<vmem>>, %arg3: memref<128x128xf32, #tpu.memory_space<vmem>>, %arg4: memref<128x128xf32, #tpu.memory_space<vmem>>, %arg5: memref<1x128xf32, #tpu.memory_space<vmem>>, %arg6: memref<1x128xf32, #tpu.memory_space<vmem>>, %arg7: memref<1x128xf32, #tpu.memory_space<vmem>>, %arg8: memref<1x128xf32, #tpu.memory_space<vmem>>, %arg9: memref<40x1xf32, #tpu.memory_space<vmem>>, %arg10: memref<40x128xf32, #tpu.memory_space<vmem>>) attributes {dimension_semantics = [], scalar_prefetch = 0 : i64, scratch_operands = 0 : i64, tpu.core_type = #tpu.core_type<tc>} {
    %c0 = arith.constant 0 : index
    %c0_0 = arith.constant 0 : index
    %0 = vector.load %arg9[%c0, %c0_0] : memref<40x1xf32, #tpu.memory_space<vmem>>, vector<40x1xf32>
    %c0_1 = arith.constant 0 : index
    %c0_2 = arith.constant 0 : index
    %1 = vector.load %arg0[%c0_1, %c0_2] : memref<40x64xbf16, #tpu.memory_space<vmem>>, vector<40x64xbf16>
    %c0_3 = arith.constant 0 : index
    %c0_4 = arith.constant 0 : index
    %c0_5 = arith.constant 0 : index
    %2 = vector.load %arg1[%c0_3, %c0_4, %c0_5] : memref<3x64x128xbf16, #tpu.memory_space<vmem>>, vector<1x64x128xbf16>
    %3 = vector.shape_cast %2 : vector<1x64x128xbf16> to vector<64x128xbf16>
    %cst = arith.constant dense<0.000000e+00> : vector<40x128xf32>
    %4 = tpu.matmul %1, %3, %cst {dimension_numbers = #tpu.dot_dimension_numbers<[1], [0], [0], [1], [0, 0, 1, 1], [], []>} : vector<40x64xbf16>, vector<64x128xbf16>, vector<40x128xf32> -> vector<40x128xf32>
    %c1 = arith.constant 1 : index
    %c0_6 = arith.constant 0 : index
    %c0_7 = arith.constant 0 : index
    %5 = vector.load %arg1[%c1, %c0_6, %c0_7] : memref<3x64x128xbf16, #tpu.memory_space<vmem>>, vector<1x64x128xbf16>
    %6 = vector.shape_cast %5 : vector<1x64x128xbf16> to vector<64x128xbf16>
    %cst_8 = arith.constant dense<0.000000e+00> : vector<40x128xf32>
    %7 = tpu.matmul %1, %6, %cst_8 {dimension_numbers = #tpu.dot_dimension_numbers<[1], [0], [0], [1], [0, 0, 1, 1], [], []>} : vector<40x64xbf16>, vector<64x128xbf16>, vector<40x128xf32> -> vector<40x128xf32>
    %c2 = arith.constant 2 : index
    %c0_9 = arith.constant 0 : index
    %c0_10 = arith.constant 0 : index
    %8 = vector.load %arg1[%c2, %c0_9, %c0_10] : memref<3x64x128xbf16, #tpu.memory_space<vmem>>, vector<1x64x128xbf16>
    %9 = vector.shape_cast %8 : vector<1x64x128xbf16> to vector<64x128xbf16>
    %cst_11 = arith.constant dense<0.000000e+00> : vector<40x128xf32>
    %10 = tpu.matmul %1, %9, %cst_11 {dimension_numbers = #tpu.dot_dimension_numbers<[1], [0], [0], [1], [0, 0, 1, 1], [], []>} : vector<40x64xbf16>, vector<64x128xbf16>, vector<40x128xf32> -> vector<40x128xf32>
    %c1_i32 = arith.constant 1 : i32
    %11 = tpu.dynamic_rotate %4 by %c1_i32 dim 0 : vector<40x128xf32>, i32 -> vector<40x128xf32>
    %12 = arith.addf %11, %7 : vector<40x128xf32>
    %c39_i32 = arith.constant 39 : i32
    %13 = tpu.dynamic_rotate %10 by %c39_i32 dim 0 : vector<40x128xf32>, i32 -> vector<40x128xf32>
    %14 = arith.addf %12, %13 : vector<40x128xf32>
    %15 = vector.broadcast %0 : vector<40x1xf32> to vector<40x128xf32>
    %16 = arith.mulf %14, %15 : vector<40x128xf32>
    %c0_12 = arith.constant 0 : index
    %c0_13 = arith.constant 0 : index
    %17 = vector.load %arg3[%c0_12, %c0_13] : memref<128x128xf32, #tpu.memory_space<vmem>>, vector<128x128xf32>
    %c0_14 = arith.constant 0 : index
    %c0_15 = arith.constant 0 : index
    %18 = vector.load %arg5[%c0_14, %c0_15] : memref<1x128xf32, #tpu.memory_space<vmem>>, vector<1x128xf32>
    %c0_16 = arith.constant 0 : index
    %c0_17 = arith.constant 0 : index
    %19 = vector.load %arg6[%c0_16, %c0_17] : memref<1x128xf32, #tpu.memory_space<vmem>>, vector<1x128xf32>
    %cst_18 = arith.constant dense<0.000000e+00> : vector<128xf32>
    %20 = vector.multi_reduction <add>, %16, %cst_18 [0] : vector<40x128xf32> to vector<128xf32>
    %21 = vector.shape_cast %20 : vector<128xf32> to vector<1x128xf32>
    %22 = arith.mulf %16, %16 : vector<40x128xf32>
    %cst_19 = arith.constant dense<0.000000e+00> : vector<128xf32>
    %23 = vector.multi_reduction <add>, %22, %cst_19 [0] : vector<40x128xf32> to vector<128xf32>
    %24 = vector.shape_cast %23 : vector<128xf32> to vector<1x128xf32>
    %25 = tpu.concatenate %21, %24 in 0 : vector<1x128xf32>, vector<1x128xf32> -> vector<2x128xf32>
    %cst_20 = arith.constant dense<0.000000e+00> : vector<2x128xf32>
    %26 = tpu.matmul %25, %17, %cst_20 {dimension_numbers = #tpu.dot_dimension_numbers<[1], [0], [0], [1], [0, 0, 1, 1], [], []>} : vector<2x128xf32>, vector<128x128xf32>, vector<2x128xf32> -> vector<2x128xf32>
    %27 = vector.extract_strided_slice %26 {offsets = [0, 0], sizes = [1, 128], strides = [1, 1]} : vector<2x128xf32> to vector<1x128xf32>
    %28 = vector.extract_strided_slice %26 {offsets = [1, 0], sizes = [1, 128], strides = [1, 1]} : vector<2x128xf32> to vector<1x128xf32>
    %29 = arith.mulf %27, %27 : vector<1x128xf32>
    %30 = arith.subf %28, %29 : vector<1x128xf32>
    %cst_21 = arith.constant 0.000000e+00 : f32
    %31 = vector.broadcast %cst_21 : f32 to vector<1x128xf32>
    %32 = arith.maximumf %30, %31 : vector<1x128xf32>
    %cst_22 = arith.constant 9.99999974E-6 : f32
    %33 = vector.broadcast %cst_22 : f32 to vector<1x128xf32>
    %34 = arith.addf %32, %33 : vector<1x128xf32>
    %35 = math.rsqrt %34 : vector<1x128xf32>
    %36 = arith.mulf %35, %18 : vector<1x128xf32>
    %37 = arith.mulf %27, %36 : vector<1x128xf32>
    %38 = arith.subf %19, %37 : vector<1x128xf32>
    %39 = vector.broadcast %36 : vector<1x128xf32> to vector<40x128xf32>
    %40 = arith.mulf %16, %39 : vector<40x128xf32>
    %41 = vector.broadcast %38 : vector<1x128xf32> to vector<40x128xf32>
    %42 = arith.addf %40, %41 : vector<40x128xf32>
    %cst_23 = arith.constant 0.000000e+00 : f32
    %43 = vector.broadcast %cst_23 : f32 to vector<40x128xf32>
    %44 = arith.maximumf %42, %43 : vector<40x128xf32>
    %45 = vector.broadcast %0 : vector<40x1xf32> to vector<40x128xf32>
    %46 = arith.mulf %44, %45 : vector<40x128xf32>
    %47 = arith.truncf %46 : vector<40x128xf32> to vector<40x128xbf16>
    %c0_24 = arith.constant 0 : index
    %c0_25 = arith.constant 0 : index
    %c0_26 = arith.constant 0 : index
    %48 = vector.load %arg2[%c0_24, %c0_25, %c0_26] : memref<3x128x128xbf16, #tpu.memory_space<vmem>>, vector<1x128x128xbf16>
    %49 = vector.shape_cast %48 : vector<1x128x128xbf16> to vector<128x128xbf16>
    %cst_27 = arith.constant dense<0.000000e+00> : vector<40x128xf32>
    %50 = tpu.matmul %47, %49, %cst_27 {dimension_numbers = #tpu.dot_dimension_numbers<[1], [0], [0], [1], [0, 0, 1, 1], [], []>} : vector<40x128xbf16>, vector<128x128xbf16>, vector<40x128xf32> -> vector<40x128xf32>
    %c1_28 = arith.constant 1 : index
    %c0_29 = arith.constant 0 : index
    %c0_30 = arith.constant 0 : index
    %51 = vector.load %arg2[%c1_28, %c0_29, %c0_30] : memref<3x128x128xbf16, #tpu.memory_space<vmem>>, vector<1x128x128xbf16>
    %52 = vector.shape_cast %51 : vector<1x128x128xbf16> to vector<128x128xbf16>
    %cst_31 = arith.constant dense<0.000000e+00> : vector<40x128xf32>
    %53 = tpu.matmul %47, %52, %cst_31 {dimension_numbers = #tpu.dot_dimension_numbers<[1], [0], [0], [1], [0, 0, 1, 1], [], []>} : vector<40x128xbf16>, vector<128x128xbf16>, vector<40x128xf32> -> vector<40x128xf32>
    %c2_32 = arith.constant 2 : index
    %c0_33 = arith.constant 0 : index
    %c0_34 = arith.constant 0 : index
    %54 = vector.load %arg2[%c2_32, %c0_33, %c0_34] : memref<3x128x128xbf16, #tpu.memory_space<vmem>>, vector<1x128x128xbf16>
    %55 = vector.shape_cast %54 : vector<1x128x128xbf16> to vector<128x128xbf16>
    %cst_35 = arith.constant dense<0.000000e+00> : vector<40x128xf32>
    %56 = tpu.matmul %47, %55, %cst_35 {dimension_numbers = #tpu.dot_dimension_numbers<[1], [0], [0], [1], [0, 0, 1, 1], [], []>} : vector<40x128xbf16>, vector<128x128xbf16>, vector<40x128xf32> -> vector<40x128xf32>
    %c1_i32_36 = arith.constant 1 : i32
    %57 = tpu.dynamic_rotate %50 by %c1_i32_36 dim 0 : vector<40x128xf32>, i32 -> vector<40x128xf32>
    %58 = arith.addf %57, %53 : vector<40x128xf32>
    %c39_i32_37 = arith.constant 39 : i32
    %59 = tpu.dynamic_rotate %56 by %c39_i32_37 dim 0 : vector<40x128xf32>, i32 -> vector<40x128xf32>
    %60 = arith.addf %58, %59 : vector<40x128xf32>
    %61 = vector.broadcast %0 : vector<40x1xf32> to vector<40x128xf32>
    %62 = arith.mulf %60, %61 : vector<40x128xf32>
    %c0_38 = arith.constant 0 : index
    %c0_39 = arith.constant 0 : index
    %63 = vector.load %arg4[%c0_38, %c0_39] : memref<128x128xf32, #tpu.memory_space<vmem>>, vector<128x128xf32>
    %c0_40 = arith.constant 0 : index
    %c0_41 = arith.constant 0 : index
    %64 = vector.load %arg7[%c0_40, %c0_41] : memref<1x128xf32, #tpu.memory_space<vmem>>, vector<1x128xf32>
    %c0_42 = arith.constant 0 : index
    %c0_43 = arith.constant 0 : index
    %65 = vector.load %arg8[%c0_42, %c0_43] : memref<1x128xf32, #tpu.memory_space<vmem>>, vector<1x128xf32>
    %cst_44 = arith.constant dense<0.000000e+00> : vector<128xf32>
    %66 = vector.multi_reduction <add>, %62, %cst_44 [0] : vector<40x128xf32> to vector<128xf32>
    %67 = vector.shape_cast %66 : vector<128xf32> to vector<1x128xf32>
    %68 = arith.mulf %62, %62 : vector<40x128xf32>
    %cst_45 = arith.constant dense<0.000000e+00> : vector<128xf32>
    %69 = vector.multi_reduction <add>, %68, %cst_45 [0] : vector<40x128xf32> to vector<128xf32>
    %70 = vector.shape_cast %69 : vector<128xf32> to vector<1x128xf32>
    %71 = tpu.concatenate %67, %70 in 0 : vector<1x128xf32>, vector<1x128xf32> -> vector<2x128xf32>
    %cst_46 = arith.constant dense<0.000000e+00> : vector<2x128xf32>
    %72 = tpu.matmul %71, %63, %cst_46 {dimension_numbers = #tpu.dot_dimension_numbers<[1], [0], [0], [1], [0, 0, 1, 1], [], []>} : vector<2x128xf32>, vector<128x128xf32>, vector<2x128xf32> -> vector<2x128xf32>
    %73 = vector.extract_strided_slice %72 {offsets = [0, 0], sizes = [1, 128], strides = [1, 1]} : vector<2x128xf32> to vector<1x128xf32>
    %74 = vector.extract_strided_slice %72 {offsets = [1, 0], sizes = [1, 128], strides = [1, 1]} : vector<2x128xf32> to vector<1x128xf32>
    %75 = arith.mulf %73, %73 : vector<1x128xf32>
    %76 = arith.subf %74, %75 : vector<1x128xf32>
    %cst_47 = arith.constant 0.000000e+00 : f32
    %77 = vector.broadcast %cst_47 : f32 to vector<1x128xf32>
    %78 = arith.maximumf %76, %77 : vector<1x128xf32>
    %cst_48 = arith.constant 9.99999974E-6 : f32
    %79 = vector.broadcast %cst_48 : f32 to vector<1x128xf32>
    %80 = arith.addf %78, %79 : vector<1x128xf32>
    %81 = math.rsqrt %80 : vector<1x128xf32>
    %82 = arith.mulf %81, %64 : vector<1x128xf32>
    %83 = arith.mulf %73, %82 : vector<1x128xf32>
    %84 = arith.subf %65, %83 : vector<1x128xf32>
    %85 = vector.broadcast %82 : vector<1x128xf32> to vector<40x128xf32>
    %86 = arith.mulf %62, %85 : vector<40x128xf32>
    %87 = vector.broadcast %84 : vector<1x128xf32> to vector<40x128xf32>
    %88 = arith.addf %86, %87 : vector<40x128xf32>
    %cst_49 = arith.constant 0.000000e+00 : f32
    %89 = vector.broadcast %cst_49 : f32 to vector<40x128xf32>
    %90 = arith.maximumf %88, %89 : vector<40x128xf32>
    %91 = vector.broadcast %0 : vector<40x1xf32> to vector<40x128xf32>
    %92 = arith.mulf %90, %91 : vector<40x128xf32>
    %c0_50 = arith.constant 0 : index
    %c0_51 = arith.constant 0 : index
    %93 = vector.load %arg10[%c0_50, %c0_51] : memref<40x128xf32, #tpu.memory_space<vmem>>, vector<40x128xf32>
    tpu.vector_store %arg10[%c0_50, %c0_51], %92 {strides = array<i32>} : memref<40x128xf32, #tpu.memory_space<vmem>>, vector<40x128xf32>,
    return
  }
}

</mosaic_0001>

<llo_original>
// kernel: tpu_custom_call.1
$region0: #{tpu_custom_call.1}
  #allocation0 [shape = 'u32[]', space=smem, size = 0x4, offset = 0x4, fixed_abs, tag = 'smem constant byte address 0x4 - core index']
  #allocation1 [shape = 'u32[144,128]{1,0:T(1,128)}', space=vmem, size = 0x12000, scoped, tag = 'internal scratch']
  %s0 = inlined_call_operand.vmem [shape: bf16[40,64], index: 0, kind: input, shape index: {}]
  %s1 = inlined_call_operand.hbm [shape: bf16[3,64,128], index: 1, kind: input, shape index: {}]
  %s2 = inlined_call_operand.hbm [shape: bf16[3,128,128], index: 2, kind: input, shape index: {}]
  %s3 = inlined_call_operand.hbm [shape: f32[128,128], index: 3, kind: input, shape index: {}]
  %s4 = inlined_call_operand.hbm [shape: f32[128,128], index: 4, kind: input, shape index: {}]
  %s5 = inlined_call_operand.vmem [shape: f32[1,128], index: 5, kind: input, shape index: {}]
  %s6 = inlined_call_operand.vmem [shape: f32[1,128], index: 6, kind: input, shape index: {}]
  %s7 = inlined_call_operand.vmem [shape: f32[1,128], index: 7, kind: input, shape index: {}]
  %s8 = inlined_call_operand.vmem [shape: f32[1,128], index: 8, kind: input, shape index: {}]
  %s9 = inlined_call_operand.vmem [shape: f32[40,1], index: 9, kind: input, shape index: {}]
  %s10 = inlined_call_operand.hbm [shape: f32[40,128], index: 10, kind: output, shape index: {}]
  %s11 = sld [smem:[#allocation0]]
  $region66: #{tpu_custom_call.1} parent=0
    _
  %s13 = ssub.s32 1, %s11
  %s14 = scalar_select 0, %s13, %s11
  $region1: #{tpu_custom_call.1} parent=0
    #allocation2 [shape = 'u8[49152]{0}', space=vmem, size = 0xc000, scoped, tag = 'input window, operand 1, single buffered']
    #allocation3 [shape = 's32[1]{0}', space=sflag, size = 0x4, scoped, tag = 'scoped memory for tpu_custom_call.1']
    #allocation4 [shape = 's32[1]{0}', space=sflag, size = 0x4, scoped, tag = 'scoped memory for tpu_custom_call.1']
    #allocation5 [shape = 'u8[98304]{0}', space=vmem, size = 0x18000, scoped, tag = 'input window, operand 2, single buffered']
    #allocation6 [shape = 's32[1]{0}', space=sflag, size = 0x4, scoped, tag = 'scoped memory for tpu_custom_call.1']
    #allocation7 [shape = 'u8[65536]{0}', space=vmem, size = 0x10000, scoped, tag = 'input window, operand 3, single buffered']
    #allocation8 [shape = 'u8[65536]{0}', space=vmem, size = 0x10000, scoped, tag = 'input window, operand 4, single buffered']
    #allocation9 [shape = 's32[1]{0}', space=sflag, size = 0x4, scoped, tag = 'scoped memory for tpu_custom_call.1']
    #allocation10 [shape = 'u8[20480]{0}', space=vmem, size = 0x5000, scoped, tag = 'output window, operand 0, single buffered']
    %15 = vsyncpa [#allocation3], 0
    %16 = vsyncpa [#allocation6], 0
    %17 = vsyncpa [#allocation9], 0
    %18 = vsyncpa [#allocation4], 0
    // Predicated region
    $region2: #{tpu_custom_call.1} parent=1 // pred_check
      _
    $region3: #{tpu_custom_call.1} parent=1 // pred_check_branch
      %20 = sbr.rel (0) target = $region5
    $region4: #{tpu_custom_call.1} parent=1 // pred_region
      _
    $region5: #{tpu_custom_call.1} parent=1 // pred_fallthru
      _
    // Predicated region
    $region6: #{tpu_custom_call.1} parent=1 // pred_check
      _
    $region7: #{tpu_custom_call.1} parent=1 // pred_check_branch
      %22 = sbr.rel (0) target = $region9
    $region8: #{tpu_custom_call.1} parent=1 // pred_region
      %s24 = ssub.s32 1536, 1536
      %25 = vsyncadd [#allocation3], %s24
      %s26 = sshll.u32 [#allocation2], 4
      %s27 = int_to_ptr.vmem [resolvable:$true] %s26
      %32 = dma.hbm_to_vmem [thread:$0]  %s1, 1536, %s27, [#allocation3], 64, 64, 4
    $region9: #{tpu_custom_call.1} parent=1 // pred_fallthru
      _
    // Predicated region
    $region10: #{tpu_custom_call.1} parent=1 // pred_check
      _
    $region11: #{tpu_custom_call.1} parent=1 // pred_check_branch
      %34 = sbr.rel (0) target = $region13
    $region12: #{tpu_custom_call.1} parent=1 // pred_region
      %s36 = ssub.s32 3072, 3072
      %37 = vsyncadd [#allocation6], %s36
      %s38 = sshll.u32 [#allocation5], 4
      %s39 = int_to_ptr.vmem [resolvable:$true] %s38
      %44 = dma.hbm_to_vmem [thread:$0]  %s2, 3072, %s39, [#allocation6], 64, 64, 4
    $region13: #{tpu_custom_call.1} parent=1 // pred_fallthru
      _
    // Predicated region
    $region14: #{tpu_custom_call.1} parent=1 // pred_check
      _
    $region15: #{tpu_custom_call.1} parent=1 // pred_check_branch
      %46 = sbr.rel (0) target = $region17
    $region16: #{tpu_custom_call.1} parent=1 // pred_region
      %s48 = ssub.s32 2048, 2048
      %49 = vsyncadd [#allocation6], %s48
      %s50 = sshll.u32 [#allocation7], 4
      %s51 = int_to_ptr.vmem [resolvable:$true] %s50
      %56 = dma.hbm_to_vmem [thread:$0]  %s3, 2048, %s51, [#allocation6], 128, 128, 8
    $region17: #{tpu_custom_call.1} parent=1 // pred_fallthru
      _
    // Predicated region
    $region18: #{tpu_custom_call.1} parent=1 // pred_check
      _
    $region19: #{tpu_custom_call.1} parent=1 // pred_check_branch
      %58 = sbr.rel (0) target = $region21
    $region20: #{tpu_custom_call.1} parent=1 // pred_region
      %s60 = ssub.s32 2048, 2048
      %61 = vsyncadd [#allocation9], %s60
      %s62 = sshll.u32 [#allocation8], 4
      %s63 = int_to_ptr.vmem [resolvable:$true] %s62
      %68 = dma.hbm_to_vmem [thread:$0]  %s4, 2048, %s63, [#allocation9], 128, 128, 8
    $region21: #{tpu_custom_call.1} parent=1 // pred_fallthru
      _
    // Predicated region
    $region22: #{tpu_custom_call.1} parent=1 // pred_check
      _
    $region23: #{tpu_custom_call.1} parent=1 // pred_check_branch
      %70 = sbr.rel (0) target = $region25
    $region24: #{tpu_custom_call.1} parent=1 // pred_region
      _
    $region25: #{tpu_custom_call.1} parent=1 // pred_fallthru
      _
    // Predicated region
    $region26: #{tpu_custom_call.1} parent=1 // pred_check
      _
    $region27: #{tpu_custom_call.1} parent=1 // pred_check_branch
      %72 = sbr.rel (0) target = $region29
    $region28: #{tpu_custom_call.1} parent=1 // pred_region
      _
    $region29: #{tpu_custom_call.1} parent=1 // pred_fallthru
      _
    // Predicated region
    $region30: #{tpu_custom_call.1} parent=1 // pred_check
      _
    $region31: #{tpu_custom_call.1} parent=1 // pred_check_branch
      %74 = sbr.rel (0) target = $region33
    $region32: #{tpu_custom_call.1} parent=1 // pred_region
      _
    $region33: #{tpu_custom_call.1} parent=1 // pred_fallthru
      _
    // Predicated region
    $region34: #{tpu_custom_call.1} parent=1 // pred_check
      _
    $region35: #{tpu_custom_call.1} parent=1 // pred_check_branch
      %76 = sbr.rel (0) target = $region37
    $region36: #{tpu_custom_call.1} parent=1 // pred_region
      _
    $region37: #{tpu_custom_call.1} parent=1 // pred_fallthru
      _
    // Predicated region
    $region38: #{tpu_custom_call.1} parent=1 // pred_check
      _
    $region39: #{tpu_custom_call.1} parent=1 // pred_check_branch
      %78 = sbr.rel (0) target = $region41
    $region40: #{tpu_custom_call.1} parent=1 // pred_region
      _
    $region41: #{tpu_custom_call.1} parent=1 // pred_fallthru
      _
    // Predicated region
    $region42: #{tpu_custom_call.1} parent=1 // pred_check
      _
    $region43: #{tpu_custom_call.1} parent=1 // pred_check_branch
      %80 = sbr.rel (0) target = $region45
    $region44: #{tpu_custom_call.1} parent=1 // pred_region
      %81 = dma.done [#allocation3], 1536
    $region45: #{tpu_custom_call.1} parent=1 // pred_fallthru
      _
    // Predicated region
    $region46: #{tpu_custom_call.1} parent=1 // pred_check
      _
    $region47: #{tpu_custom_call.1} parent=1 // pred_check_branch
      %83 = sbr.rel (0) target = $region49
    $region48: #{tpu_custom_call.1} parent=1 // pred_region
      %84 = dma.done [#allocation6], 3072
    $region49: #{tpu_custom_call.1} parent=1 // pred_fallthru
      _
    // Predicated region
    $region50: #{tpu_custom_call.1} parent=1 // pred_check
      _
    $region51: #{tpu_custom_call.1} parent=1 // pred_check_branch
      %86 = sbr.rel (0) target = $region53
    $region52: #{tpu_custom_call.1} parent=1 // pred_region
      %87 = dma.done [#allocation6], 2048
    $region53: #{tpu_custom_call.1} parent=1 // pred_fallthru
      _
    // Predicated region
    $region54: #{tpu_custom_call.1} parent=1 // pred_check
      _
    $region55: #{tpu_custom_call.1} parent=1 // pred_check_branch
      %89 = sbr.rel (0) target = $region57
    $region56: #{tpu_custom_call.1} parent=1 // pred_region
      %90 = dma.done [#allocation9], 2048
    $region57: #{tpu_custom_call.1} parent=1 // pred_fallthru
      _
    %v92 = vld [vmem:[%s9] sm:$0xff]
    %v93 = vld [vmem:[%s9 + $0x8] sm:$0xff]
    %v94 = vld [vmem:[%s9 + $0x10] sm:$0xff]
    %v95 = vld [vmem:[%s9 + $0x18] sm:$0xff]
    %v96 = vld [vmem:[%s9 + $0x20] sm:$0xff]
    %v97 = vld [vmem:[%s0] sm:$0xf]
    %v98 = vld [vmem:[%s0 + $0x4] sm:$0xf]
    %v99 = vld [vmem:[%s0 + $0x8] sm:$0xf]
    %v100 = vld [vmem:[%s0 + $0xc] sm:$0xf]
    %v101 = vld [vmem:[%s0 + $0x10] sm:$0xf]
    %v102 = vld [vmem:[#allocation2] sm:$0xf]
    %v103 = vld [vmem:[#allocation2 + $0x4] sm:$0xf]
    %v104 = vld [vmem:[#allocation2 + $0x8] sm:$0xf]
    %v105 = vld [vmem:[#allocation2 + $0xc] sm:$0xf]
    %v106 = vld [vmem:[#allocation2 + $0x10] sm:$0xf]
    %v107 = vld [vmem:[#allocation2 + $0x14] sm:$0xf]
    %v108 = vld [vmem:[#allocation2 + $0x18] sm:$0xf]
    %v109 = vld [vmem:[#allocation2 + $0x1c] sm:$0xf]
    %v115 = vunpack.c.l.b16 %v97
    %v116 = vunpack.c.l.b16 %v98
    %v117 = vunpack.c.l.b16 %v99
    %v118 = vunpack.c.l.b16 %v100
    %v119 = vunpack.c.l.b16 %v101
    %v120 = vpack.c.b16 %v116, %v115
    %v121 = vpack.c.b16 %v118, %v117
    %v122 = vpack.c.b16 %v119, %v119
    %v131 = vunpack.c.l.b16 %v102
    %v132 = vunpack.c.l.b16 %v103
    %v133 = vunpack.c.l.b16 %v104
    %v134 = vunpack.c.l.b16 %v105
    %v135 = vunpack.c.l.b16 %v106
    %v136 = vunpack.c.l.b16 %v107
    %v137 = vunpack.c.l.b16 %v108
    %v138 = vunpack.c.l.b16 %v109
    %v139 = vpack.c.b16 %v132, %v131
    %v140 = vpack.c.b16 %v134, %v133
    %v141 = vpack.c.b16 %v136, %v135
    %v142 = vpack.c.b16 %v138, %v137
    %vm147 = vcmask 523264
    %v149 = vsel %vm147, %v120, 0
    %v152 = vsel %vm147, %v121, 0
    %v155 = vsel %vm147, %v122, 0
    %157 = vmatprep.subr.bf16.mxu0 0
    %158 = vmatpush1.bf16.msra.mxu0 %v139
    %159 = vmatprep.subr.bf16.mxu0 0
    %160 = vmatpush1.bf16.msra.mxu0 %v140
    %161 = vmatprep.subr.bf16.mxu0 0
    %162 = vmatpush1.bf16.msra.mxu0 %v141
    %163 = vmatprep.subr.bf16.mxu0 0
    %164 = vmatpush1.bf16.msra.mxu0 %v142
    %165 = vmatprep.subr.bf16.mxu0 0
    %166 = vmatpush1.bf16.msra.mxu0 0
    %167 = vmatprep.subr.bf16.mxu0 0
    %168 = vmatpush1.bf16.msra.mxu0 0
    %169 = vmatprep.subr.bf16.mxu0 0
    %170 = vmatpush1.bf16.msra.mxu0 0
    %171 = vmatprep.subr.bf16.mxu0 0
    %172 = vmatpush1.bf16.msra.mxu0 0
    %173 = vmatprep.subr.bf16.mxu0 0
    %174 = vmatpush1.bf16.msra.mxu0 0
    %175 = vmatprep.subr.bf16.mxu0 0
    %176 = vmatpush1.bf16.msra.mxu0 0
    %177 = vmatprep.subr.bf16.mxu0 0
    %178 = vmatpush1.bf16.msra.mxu0 0
    %179 = vmatprep.subr.bf16.mxu0 0
    %180 = vmatpush1.bf16.msra.mxu0 0
    %181 = vmatprep.subr.bf16.mxu0 0
    %182 = vmatpush1.bf16.msra.mxu0 0
    %183 = vmatprep.subr.bf16.mxu0 0
    %184 = vmatpush1.bf16.msra.mxu0 0
    %185 = vmatprep.subr.bf16.mxu0 0
    %186 = vmatpush1.bf16.msra.mxu0 0
    %187 = vmatprep.subr.bf16.mxu0 0
    %188 = vmatpush1.bf16.msra.mxu0 0
    %189 = vmatprep.mubr.bf16.mxu0 0
    %190 = vmatmul.mubr.bf16.gmra.mrb[0].mxu0 %v149
    %v191 = vpop.f32.mrb[0].mxu0
    %v192 = vadd.f32 0.0, %v191
    %v193 = vpop.f32.mrb[0].mxu0
    %v194 = vpop.f32.mrb[0].mxu0
    %v195 = vadd.f32 0.0, %v194
    %v196 = vpop.f32.mrb[0].mxu0
    %197 = vmatprep.mubr.bf16.mxu0 0
    %198 = vmatmul.mubr.bf16.gmra.mrb[0].mxu0 %v152
    %v199 = vpop.f32.mrb[0].mxu0
    %v200 = vadd.f32 0.0, %v199
    %v201 = vpop.f32.mrb[0].mxu0
    %v202 = vpop.f32.mrb[0].mxu0
    %v203 = vadd.f32 0.0, %v202
    %v204 = vpop.f32.mrb[0].mxu0
    %205 = vmatprep.mubr.bf16.mxu0 0
    %206 = vmatmul.mubr.bf16.gmra.mrb[0].mxu0 %v155
    %v207 = vpop.f32.mrb[0].mxu0
    %v208 = vadd.f32 0.0, %v207
    %v209 = vpop.f32.mrb[0].mxu0
    %v210 = vpop.f32.mrb[0].mxu0
    %v211 = vpop.f32.mrb[0].mxu0
    %212 = vdwg.mxu0
    %s213 = scalar_lea.vmem [#allocation2], 32
    %v214 = vld [vmem:[%s213] sm:$0xf]
    %v215 = vld [vmem:[%s213 + $0x4] sm:$0xf]
    %v216 = vld [vmem:[%s213 + $0x8] sm:$0xf]
    %v217 = vld [vmem:[%s213 + $0xc] sm:$0xf]
    %v218 = vld [vmem:[%s213 + $0x10] sm:$0xf]
    %v219 = vld [vmem:[%s213 + $0x14] sm:$0xf]
    %v220 = vld [vmem:[%s213 + $0x18] sm:$0xf]
    %v221 = vld [vmem:[%s213 + $0x1c] sm:$0xf]
    %v230 = vunpack.c.l.b16 %v214
    %v231 = vunpack.c.l.b16 %v215
    %v232 = vunpack.c.l.b16 %v216
    %v233 = vunpack.c.l.b16 %v217
    %v234 = vunpack.c.l.b16 %v218
    %v235 = vunpack.c.l.b16 %v219
    %v236 = vunpack.c.l.b16 %v220
    %v237 = vunpack.c.l.b16 %v221
    %v238 = vpack.c.b16 %v231, %v230
    %v239 = vpack.c.b16 %v233, %v232
    %v240 = vpack.c.b16 %v235, %v234
    %v241 = vpack.c.b16 %v237, %v236
    %246 = vmatprep.subr.bf16.mxu0 0
    %247 = vmatpush1.bf16.msra.mxu0 %v238
    %248 = vmatprep.subr.bf16.mxu0 0
    %249 = vmatpush1.bf16.msra.mxu0 %v239
    %250 = vmatprep.subr.bf16.mxu0 0
    %251 = vmatpush1.bf16.msra.mxu0 %v240
    %252 = vmatprep.subr.bf16.mxu0 0
    %253 = vmatpush1.bf16.msra.mxu0 %v241
    %254 = vmatprep.subr.bf16.mxu0 0
    %255 = vmatpush1.bf16.msra.mxu0 0
    %256 = vmatprep.subr.bf16.mxu0 0
    %257 = vmatpush1.bf16.msra.mxu0 0
    %258 = vmatprep.subr.bf16.mxu0 0
    %259 = vmatpush1.bf16.msra.mxu0 0
    %260 = vmatprep.subr.bf16.mxu0 0
    %261 = vmatpush1.bf16.msra.mxu0 0
    %262 = vmatprep.subr.bf16.mxu0 0
    %263 = vmatpush1.bf16.msra.mxu0 0
    %264 = vmatprep.subr.bf16.mxu0 0
    %265 = vmatpush1.bf16.msra.mxu0 0
    %266 = vmatprep.subr.bf16.mxu0 0
    %267 = vmatpush1.bf16.msra.mxu0 0
    %268 = vmatprep.subr.bf16.mxu0 0
    %269 = vmatpush1.bf16.msra.mxu0 0
    %270 = vmatprep.subr.bf16.mxu0 0
    %271 = vmatpush1.bf16.msra.mxu0 0
    %272 = vmatprep.subr.bf16.mxu0 0
    %273 = vmatpush1.bf16.msra.mxu0 0
    %274 = vmatprep.subr.bf16.mxu0 0
    %275 = vmatpush1.bf16.msra.mxu0 0
    %276 = vmatprep.subr.bf16.mxu0 0
    %277 = vmatpush1.bf16.msra.mxu0 0
    %278 = vmatprep.mubr.bf16.mxu0 0
    %279 = vmatmul.mubr.bf16.gmra.mrb[0].mxu0 %v149
    %v280 = vpop.f32.mrb[0].mxu0
    %v281 = vadd.f32 0.0, %v280
    %v282 = vpop.f32.mrb[0].mxu0
    %v283 = vpop.f32.mrb[0].mxu0
    %v284 = vadd.f32 0.0, %v283
    %v285 = vpop.f32.mrb[0].mxu0
    %286 = vmatprep.mubr.bf16.mxu0 0
    %287 = vmatmul.mubr.bf16.gmra.mrb[0].mxu0 %v152
    %v288 = vpop.f32.mrb[0].mxu0
    %v289 = vadd.f32 0.0, %v288
    %v290 = vpop.f32.mrb[0].mxu0
    %v291 = vpop.f32.mrb[0].mxu0
    %v292 = vadd.f32 0.0, %v291
    %v293 = vpop.f32.mrb[0].mxu0
    %294 = vmatprep.mubr.bf16.mxu0 0
    %295 = vmatmul.mubr.bf16.gmra.mrb[0].mxu0 %v155
    %v296 = vpop.f32.mrb[0].mxu0
    %v297 = vadd.f32 0.0, %v296
    %v298 = vpop.f32.mrb[0].mxu0
    %v299 = vpop.f32.mrb[0].mxu0
    %v300 = vpop.f32.mrb[0].mxu0
    %301 = vdwg.mxu0
    %s302 = scalar_lea.vmem [#allocation2], 64
    %v303 = vld [vmem:[%s302] sm:$0xf]
    %v304 = vld [vmem:[%s302 + $0x4] sm:$0xf]
    %v305 = vld [vmem:[%s302 + $0x8] sm:$0xf]
    %v306 = vld [vmem:[%s302 + $0xc] sm:$0xf]
    %v307 = vld [vmem:[%s302 + $0x10] sm:$0xf]
    %v308 = vld [vmem:[%s302 + $0x14] sm:$0xf]
    %v309 = vld [vmem:[%s302 + $0x18] sm:$0xf]
    %v310 = vld [vmem:[%s302 + $0x1c] sm:$0xf]
    %v319 = vunpack.c.l.b16 %v303
    %v320 = vunpack.c.l.b16 %v304
    %v321 = vunpack.c.l.b16 %v305
    %v322 = vunpack.c.l.b16 %v306
    %v323 = vunpack.c.l.b16 %v307
    %v324 = vunpack.c.l.b16 %v308
    %v325 = vunpack.c.l.b16 %v309
    %v326 = vunpack.c.l.b16 %v310
    %v327 = vpack.c.b16 %v320, %v319
    %v328 = vpack.c.b16 %v322, %v321
    %v329 = vpack.c.b16 %v324, %v323
    %v330 = vpack.c.b16 %v326, %v325
    %335 = vmatprep.subr.bf16.mxu0 0
    %336 = vmatpush1.bf16.msra.mxu0 %v327
    %337 = vmatprep.subr.bf16.mxu0 0
    %338 = vmatpush1.bf16.msra.mxu0 %v328
    %339 = vmatprep.subr.bf16.mxu0 0
    %340 = vmatpush1.bf16.msra.mxu0 %v329
    %341 = vmatprep.subr.bf16.mxu0 0
    %342 = vmatpush1.bf16.msra.mxu0 %v330
    %343 = vmatprep.subr.bf16.mxu0 0
    %344 = vmatpush1.bf16.msra.mxu0 0
    %345 = vmatprep.subr.bf16.mxu0 0
    %346 = vmatpush1.bf16.msra.mxu0 0
    %347 = vmatprep.subr.bf16.mxu0 0
    %348 = vmatpush1.bf16.msra.mxu0 0
    %349 = vmatprep.subr.bf16.mxu0 0
    %350 = vmatpush1.bf16.msra.mxu0 0
    %351 = vmatprep.subr.bf16.mxu0 0
    %352 = vmatpush1.bf16.msra.mxu0 0
    %353 = vmatprep.subr.bf16.mxu0 0
    %354 = vmatpush1.bf16.msra.mxu0 0
    %355 = vmatprep.subr.bf16.mxu0 0
    %356 = vmatpush1.bf16.msra.mxu0 0
    %357 = vmatprep.subr.bf16.mxu0 0
    %358 = vmatpush1.bf16.msra.mxu0 0
    %359 = vmatprep.subr.bf16.mxu0 0
    %360 = vmatpush1.bf16.msra.mxu0 0
    %361 = vmatprep.subr.bf16.mxu0 0
    %362 = vmatpush1.bf16.msra.mxu0 0
    %363 = vmatprep.subr.bf16.mxu0 0
    %364 = vmatpush1.bf16.msra.mxu0 0
    %365 = vmatprep.subr.bf16.mxu0 0
    %366 = vmatpush1.bf16.msra.mxu0 0
    %367 = vmatprep.mubr.bf16.mxu0 0
    %368 = vmatmul.mubr.bf16.gmra.mrb[0].mxu0 %v149
    %v369 = vpop.f32.mrb[0].mxu0
    %v370 = vadd.f32 0.0, %v369
    %v371 = vpop.f32.mrb[0].mxu0
    %v372 = vpop.f32.mrb[0].mxu0
    %v373 = vadd.f32 0.0, %v372
    %v374 = vpop.f32.mrb[0].mxu0
    %375 = vmatprep.mubr.bf16.mxu0 0
    %376 = vmatmul.mubr.bf16.gmra.mrb[0].mxu0 %v152
    %v377 = vpop.f32.mrb[0].mxu0
    %v378 = vadd.f32 0.0, %v377
    %v379 = vpop.f32.mrb[0].mxu0
    %v380 = vpop.f32.mrb[0].mxu0
    %v381 = vadd.f32 0.0, %v380
    %v382 = vpop.f32.mrb[0].mxu0
    %383 = vmatprep.mubr.bf16.mxu0 0
    %384 = vmatmul.mubr.bf16.gmra.mrb[0].mxu0 %v155
    %v385 = vpop.f32.mrb[0].mxu0
    %v386 = vadd.f32 0.0, %v385
    %v387 = vpop.f32.mrb[0].mxu0
    %v388 = vpop.f32.mrb[0].mxu0
    %v389 = vpop.f32.mrb[0].mxu0
    %390 = vdwg.mxu0
    %v391 = vrot.slane %v192, 7
    %v392 = vrot.slane %v195, 7
    %v393 = vrot.slane %v200, 7
    %v394 = vrot.slane %v203, 7
    %v395 = vrot.slane %v208, 7
    %v396 = vlaneseq
    %v397 = vshrl.u32 %v396, 7
    %vm398 = vcmp.lt.s32.totalorder %v397, 1
    %v399 = vsel %vm398, %v394, %v395
    %v400 = vsel %vm398, %v393, %v394
    %v401 = vsel %vm398, %v392, %v393
    %v402 = vsel %vm398, %v391, %v392
    %v403 = vsel %vm398, %v395, %v391
    %v404 = vadd.f32 %v403, %v281
    %v405 = vadd.f32 %v402, %v284
    %v406 = vadd.f32 %v401, %v289
    %v407 = vadd.f32 %v400, %v292
    %v408 = vadd.f32 %v399, %v297
    %v409 = vrot.slane %v370, 1
    %v410 = vrot.slane %v373, 1
    %v411 = vrot.slane %v378, 1
    %v412 = vrot.slane %v381, 1
    %v413 = vrot.slane %v386, 1
    %vm414 = vcmp.lt.s32.totalorder %v397, 7
    %v415 = vsel %vm414, %v412, %v413
    %v416 = vsel %vm414, %v411, %v412
    %v417 = vsel %vm414, %v410, %v411
    %v418 = vsel %vm414, %v409, %v410
    %v419 = vsel %vm414, %v413, %v409
    %v420 = vadd.f32 %v404, %v418
    %v421 = vadd.f32 %v405, %v417
    %v422 = vadd.f32 %v406, %v416
    %v423 = vadd.f32 %v407, %v415
    %v424 = vadd.f32 %v408, %v419
    %426 = vset.pattern.permute.xlu0 0
    %427 = vperm.xlu0 %426, %v92
    %v428 = vpop.permute.xlu0 %427
    %431 = vset.pattern.permute.xlu0 0
    %432 = vperm.xlu0 %431, %v93
    %v433 = vpop.permute.xlu0 %432
    %436 = vset.pattern.permute.xlu0 0
    %437 = vperm.xlu0 %436, %v94
    %v438 = vpop.permute.xlu0 %437
    %441 = vset.pattern.permute.xlu0 0
    %442 = vperm.xlu0 %441, %v95
    %v443 = vpop.permute.xlu0 %442
    %446 = vset.pattern.permute.xlu0 0
    %447 = vperm.xlu0 %446, %v96
    %v448 = vpop.permute.xlu0 %447
    %v450 = vmul.f32 %v420, %v428
    %v451 = vmul.f32 %v421, %v433
    %v452 = vmul.f32 %v422, %v438
    %v453 = vmul.f32 %v423, %v443
    %v454 = vmul.f32 %v424, %v448
    %v455 = vld [vmem:[#allocation7] sm:$0xff]
    %v456 = vld [vmem:[#allocation7 + $0x8] sm:$0xff]
    %v457 = vld [vmem:[#allocation7 + $0x10] sm:$0xff]
    %v458 = vld [vmem:[#allocation7 + $0x18] sm:$0xff]
    %v459 = vld [vmem:[#allocation7 + $0x20] sm:$0xff]
    %v460 = vld [vmem:[#allocation7 + $0x28] sm:$0xff]
    %v461 = vld [vmem:[#allocation7 + $0x30] sm:$0xff]
    %v462 = vld [vmem:[#allocation7 + $0x38] sm:$0xff]
    %v463 = vld [vmem:[#allocation7 + $0x40] sm:$0xff]
    %v464 = vld [vmem:[#allocation7 + $0x48] sm:$0xff]
    %v465 = vld [vmem:[#allocation7 + $0x50] sm:$0xff]
    %v466 = vld [vmem:[#allocation7 + $0x58] sm:$0xff]
    %v467 = vld [vmem:[#allocation7 + $0x60] sm:$0xff]
    %v468 = vld [vmem:[#allocation7 + $0x68] sm:$0xff]
    %v469 = vld [vmem:[#allocation7 + $0x70] sm:$0xff]
    %v470 = vld [vmem:[#allocation7 + $0x78] sm:$0xff]
    %v471 = vld [vmem:[%s5] sm:$0x1]
    %v472 = vld [vmem:[%s6] sm:$0x1]
    %v473 = vadd.f32 %v450, %v451
    %v474 = vadd.f32 %v473, %v452
    %v475 = vadd.f32 %v474, %v453
    %v476 = vadd.f32 %v475, %v454
    %v477 = vrot.slane %v476, 4
    %v478 = vadd.f32 %v476, %v477
    %v479 = vrot.slane %v478, 2
    %v480 = vadd.f32 %v478, %v479
    %v481 = vrot.slane %v480, 1
    %v482 = vadd.f32 %v480, %v481
    %v483 = vmul.f32 %v450, %v450
    %v484 = vmul.f32 %v451, %v451
    %v485 = vmul.f32 %v452, %v452
    %v486 = vmul.f32 %v453, %v453
    %v487 = vmul.f32 %v454, %v454
    %v488 = vadd.f32 %v483, %v484
    %v489 = vadd.f32 %v488, %v485
    %v490 = vadd.f32 %v489, %v486
    %v491 = vadd.f32 %v490, %v487
    %v492 = vrot.slane %v491, 4
    %v493 = vadd.f32 %v491, %v492
    %v494 = vrot.slane %v493, 2
    %v495 = vadd.f32 %v493, %v494
    %v496 = vrot.slane %v495, 1
    %v497 = vadd.f32 %v495, %v496
    %vm498 = vcmask 1040384
    %v499 = vsel %vm498, %v482, %v497
    %500 = vmatprep.subr.mxu0 0.0
    %501 = vmatpush1.msra.mxu0 %v455
    %502 = vmatprep.subr.mxu0 0.0
    %503 = vmatpush1.msra.mxu0 %v456
    %504 = vmatprep.subr.mxu0 0.0
    %505 = vmatpush1.msra.mxu0 %v457
    %506 = vmatprep.subr.mxu0 0.0
    %507 = vmatpush1.msra.mxu0 %v458
    %508 = vmatprep.subr.mxu0 0.0
    %509 = vmatpush1.msra.mxu0 %v459
    %510 = vmatprep.subr.mxu0 0.0
    %511 = vmatpush1.msra.mxu0 %v460
    %512 = vmatprep.subr.mxu0 0.0
    %513 = vmatpush1.msra.mxu0 %v461
    %514 = vmatprep.subr.mxu0 0.0
    %515 = vmatpush1.msra.mxu0 %v462
    %516 = vmatprep.subr.mxu0 0.0
    %517 = vmatpush1.msra.mxu0 %v463
    %518 = vmatprep.subr.mxu0 0.0
    %519 = vmatpush1.msra.mxu0 %v464
    %520 = vmatprep.subr.mxu0 0.0
    %521 = vmatpush1.msra.mxu0 %v465
    %522 = vmatprep.subr.mxu0 0.0
    %523 = vmatpush1.msra.mxu0 %v466
    %524 = vmatprep.subr.mxu0 0.0
    %525 = vmatpush1.msra.mxu0 %v467
    %526 = vmatprep.subr.mxu0 0.0
    %527 = vmatpush1.msra.mxu0 %v468
    %528 = vmatprep.subr.mxu0 0.0
    %529 = vmatpush1.msra.mxu0 %v469
    %530 = vmatprep.subr.mxu0 0.0
    %531 = vmatpush1.msra.mxu0 %v470
    %532 = vmatprep.subr.mxu0 0.0
    %533 = vmatpush1.msra.mxu0 0.0
    %534 = vmatprep.subr.mxu0 0.0
    %535 = vmatpush1.msra.mxu0 0.0
    %536 = vmatprep.subr.mxu0 0.0
    %537 = vmatpush1.msra.mxu0 0.0
    %538 = vmatprep.subr.mxu0 0.0
    %539 = vmatpush1.msra.mxu0 0.0
    %540 = vmatprep.subr.mxu0 0.0
    %541 = vmatpush1.msra.mxu0 0.0
    %542 = vmatprep.subr.mxu0 0.0
    %543 = vmatpush1.msra.mxu0 0.0
    %544 = vmatprep.subr.mxu0 0.0
    %545 = vmatpush1.msra.mxu0 0.0
    %546 = vmatprep.subr.mxu0 0.0
    %547 = vmatpush1.msra.mxu0 0.0
    %548 = vmatprep.subr.mxu0 0.0
    %549 = vmatpush1.msra.mxu0 0.0
    %550 = vmatprep.subr.mxu0 0.0
    %551 = vmatpush1.msra.mxu0 0.0
    %552 = vmatprep.subr.mxu0 0.0
    %553 = vmatpush1.msra.mxu0 0.0
    %554 = vmatprep.subr.mxu0 0.0
    %555 = vmatpush1.msra.mxu0 0.0
    %556 = vmatprep.subr.mxu0 0.0
    %557 = vmatpush1.msra.mxu0 0.0
    %558 = vmatprep.subr.mxu0 0.0
    %559 = vmatpush1.msra.mxu0 0.0
    %560 = vmatprep.subr.mxu0 0.0
    %561 = vmatpush1.msra.mxu0 0.0
    %562 = vmatprep.subr.mxu0 0.0
    %563 = vmatpush1.msra.mxu0 0.0
    %564 = vmatprep.mubr.f32.mxu0 0.0
    %565 = vmatmul.mubr.f32.gmra.mrb[0].mxu0 %v499
    %v566 = vpop.f32.mrb[0].mxu0
    %v567 = vadd.f32 0.0, %v566
    %v568 = vpop.f32.mrb[0].mxu0
    %569 = vdwg.mxu0
    %v570 = vmul.f32 %v567, %v567
    %v572 = vrot.slane %v570, 7
    %v574 = vsub.f32 %v567, %v572
    %v575 = vmax.f32 %v574, 0.0
    %v576 = vadd.f32 %v575, 1e-05
    %v577 = vrsqrt.pop %v576
    %v579 = vlaneseq
    %v580 = vshrl.u32 %v579, 7
    %v581 = vsub.s32 0, %v580
    %v582 = vrot.slane %v471, %v581
    %v584 = vmul.f32 %v577, %v582
    %v586 = vrot.slane %v584, 1
    %v588 = vmul.f32 %v567, %v586
    %v589 = vsub.f32 %v472, %v588
    %v590 = vlaneseq
    %v591 = vshrl.u32 %v590, 7
    %v592 = vsub.s32 1, %v591
    %v593 = vrot.slane %v584, %v592
    %v594 = vmul.f32 %v450, %v593
    %v595 = vmul.f32 %v451, %v593
    %v596 = vmul.f32 %v452, %v593
    %v597 = vmul.f32 %v453, %v593
    %v598 = vmul.f32 %v454, %v593
    %v600 = vlaneseq
    %v601 = vshrl.u32 %v600, 7
    %v602 = vsub.s32 0, %v601
    %v603 = vrot.slane %v589, %v602
    %v605 = vadd.f32 %v594, %v603
    %v606 = vadd.f32 %v595, %v603
    %v607 = vadd.f32 %v596, %v603
    %v608 = vadd.f32 %v597, %v603
    %v609 = vadd.f32 %v598, %v603
    %v610 = vmax.f32 %v605, 0.0
    %v611 = vmax.f32 %v606, 0.0
    %v612 = vmax.f32 %v607, 0.0
    %v613 = vmax.f32 %v608, 0.0
    %v614 = vmax.f32 %v609, 0.0
    %v615 = vmul.f32 %v610, %v428
    %v616 = vmul.f32 %v611, %v433
    %v617 = vmul.f32 %v612, %v438
    %v618 = vmul.f32 %v613, %v443
    %v619 = vmul.f32 %v614, %v448
    %v620 = vpack.c.bf16 %v616, %v615
    %v621 = vpack.c.bf16 %v618, %v617
    %v622 = vpack.c.bf16 %v619, %v619
    %v623 = vld [vmem:[#allocation5] sm:$0xf]
    %v624 = vld [vmem:[#allocation5 + $0x4] sm:$0xf]
    %v625 = vld [vmem:[#allocation5 + $0x8] sm:$0xf]
    %v626 = vld [vmem:[#allocation5 + $0xc] sm:$0xf]
    %v627 = vld [vmem:[#allocation5 + $0x10] sm:$0xf]
    %v628 = vld [vmem:[#allocation5 + $0x14] sm:$0xf]
    %v629 = vld [vmem:[#allocation5 + $0x18] sm:$0xf]
    %v630 = vld [vmem:[#allocation5 + $0x1c] sm:$0xf]
    %v631 = vld [vmem:[#allocation5 + $0x20] sm:$0xf]
    %v632 = vld [vmem:[#allocation5 + $0x24] sm:$0xf]
    %v633 = vld [vmem:[#allocation5 + $0x28] sm:$0xf]
    %v634 = vld [vmem:[#allocation5 + $0x2c] sm:$0xf]
    %v635 = vld [vmem:[#allocation5 + $0x30] sm:$0xf]
    %v636 = vld [vmem:[#allocation5 + $0x34] sm:$0xf]
    %v637 = vld [vmem:[#allocation5 + $0x38] sm:$0xf]
    %v638 = vld [vmem:[#allocation5 + $0x3c] sm:$0xf]
    %v655 = vunpack.c.l.b16 %v623
    %v656 = vunpack.c.l.b16 %v624
    %v657 = vunpack.c.l.b16 %v625
    %v658 = vunpack.c.l.b16 %v626
    %v659 = vunpack.c.l.b16 %v627
    %v660 = vunpack.c.l.b16 %v628
    %v661 = vunpack.c.l.b16 %v629
    %v662 = vunpack.c.l.b16 %v630
    %v663 = vunpack.c.l.b16 %v631
    %v664 = vunpack.c.l.b16 %v632
    %v665 = vunpack.c.l.b16 %v633
    %v666 = vunpack.c.l.b16 %v634
    %v667 = vunpack.c.l.b16 %v635
    %v668 = vunpack.c.l.b16 %v636
    %v669 = vunpack.c.l.b16 %v637
    %v670 = vunpack.c.l.b16 %v638
    %v671 = vpack.c.b16 %v656, %v655
    %v672 = vpack.c.b16 %v658, %v657
    %v673 = vpack.c.b16 %v660, %v659
    %v674 = vpack.c.b16 %v662, %v661
    %v675 = vpack.c.b16 %v664, %v663
    %v676 = vpack.c.b16 %v666, %v665
    %v677 = vpack.c.b16 %v668, %v667
    %v678 = vpack.c.b16 %v670, %v669
    %687 = vmatprep.subr.bf16.mxu0 0
    %688 = vmatpush1.bf16.msra.mxu0 %v671
    %689 = vmatprep.subr.bf16.mxu0 0
    %690 = vmatpush1.bf16.msra.mxu0 %v672
    %691 = vmatprep.subr.bf16.mxu0 0
    %692 = vmatpush1.bf16.msra.mxu0 %v673
    %693 = vmatprep.subr.bf16.mxu0 0
    %694 = vmatpush1.bf16.msra.mxu0 %v674
    %695 = vmatprep.subr.bf16.mxu0 0
    %696 = vmatpush1.bf16.msra.mxu0 %v675
    %697 = vmatprep.subr.bf16.mxu0 0
    %698 = vmatpush1.bf16.msra.mxu0 %v676
    %699 = vmatprep.subr.bf16.mxu0 0
    %700 = vmatpush1.bf16.msra.mxu0 %v677
    %701 = vmatprep.subr.bf16.mxu0 0
    %702 = vmatpush1.bf16.msra.mxu0 %v678
    %703 = vmatprep.subr.bf16.mxu0 0
    %704 = vmatpush1.bf16.msra.mxu0 0
    %705 = vmatprep.subr.bf16.mxu0 0
    %706 = vmatpush1.bf16.msra.mxu0 0
    %707 = vmatprep.subr.bf16.mxu0 0
    %708 = vmatpush1.bf16.msra.mxu0 0
    %709 = vmatprep.subr.bf16.mxu0 0
    %710 = vmatpush1.bf16.msra.mxu0 0
    %711 = vmatprep.subr.bf16.mxu0 0
    %712 = vmatpush1.bf16.msra.mxu0 0
    %713 = vmatprep.subr.bf16.mxu0 0
    %714 = vmatpush1.bf16.msra.mxu0 0
    %715 = vmatprep.subr.bf16.mxu0 0
    %716 = vmatpush1.bf16.msra.mxu0 0
    %717 = vmatprep.subr.bf16.mxu0 0
    %718 = vmatpush1.bf16.msra.mxu0 0
    %719 = vmatprep.mubr.bf16.mxu0 0
    %720 = vmatmul.mubr.bf16.gmra.mrb[0].mxu0 %v620
    %v721 = vpop.f32.mrb[0].mxu0
    %v722 = vadd.f32 0.0, %v721
    %v723 = vpop.f32.mrb[0].mxu0
    %v724 = vpop.f32.mrb[0].mxu0
    %v725 = vadd.f32 0.0, %v724
    %v726 = vpop.f32.mrb[0].mxu0
    %727 = vmatprep.mubr.bf16.mxu0 0
    %728 = vmatmul.mubr.bf16.gmra.mrb[0].mxu0 %v621
    %v729 = vpop.f32.mrb[0].mxu0
    %v730 = vadd.f32 0.0, %v729
    %v731 = vpop.f32.mrb[0].mxu0
    %v732 = vpop.f32.mrb[0].mxu0
    %v733 = vadd.f32 0.0, %v732
    %v734 = vpop.f32.mrb[0].mxu0
    %735 = vmatprep.mubr.bf16.mxu0 0
    %736 = vmatmul.mubr.bf16.gmra.mrb[0].mxu0 %v622
    %v737 = vpop.f32.mrb[0].mxu0
    %v738 = vadd.f32 0.0, %v737
    %v739 = vpop.f32.mrb[0].mxu0
    %v740 = vpop.f32.mrb[0].mxu0
    %v741 = vpop.f32.mrb[0].mxu0
    %742 = vdwg.mxu0
    %s743 = scalar_lea.vmem [#allocation5], 64
    %v744 = vld [vmem:[%s743] sm:$0xf]
    %v745 = vld [vmem:[%s743 + $0x4] sm:$0xf]
    %v746 = vld [vmem:[%s743 + $0x8] sm:$0xf]
    %v747 = vld [vmem:[%s743 + $0xc] sm:$0xf]
    %v748 = vld [vmem:[%s743 + $0x10] sm:$0xf]
    %v749 = vld [vmem:[%s743 + $0x14] sm:$0xf]
    %v750 = vld [vmem:[%s743 + $0x18] sm:$0xf]
    %v751 = vld [vmem:[%s743 + $0x1c] sm:$0xf]
    %v752 = vld [vmem:[%s743 + $0x20] sm:$0xf]
    %v753 = vld [vmem:[%s743 + $0x24] sm:$0xf]
    %v754 = vld [vmem:[%s743 + $0x28] sm:$0xf]
    %v755 = vld [vmem:[%s743 + $0x2c] sm:$0xf]
    %v756 = vld [vmem:[%s743 + $0x30] sm:$0xf]
    %v757 = vld [vmem:[%s743 + $0x34] sm:$0xf]
    %v758 = vld [vmem:[%s743 + $0x38] sm:$0xf]
    %v759 = vld [vmem:[%s743 + $0x3c] sm:$0xf]
    %v776 = vunpack.c.l.b16 %v744
    %v777 = vunpack.c.l.b16 %v745
    %v778 = vunpack.c.l.b16 %v746
    %v779 = vunpack.c.l.b16 %v747
    %v780 = vunpack.c.l.b16 %v748
    %v781 = vunpack.c.l.b16 %v749
    %v782 = vunpack.c.l.b16 %v750
    %v783 = vunpack.c.l.b16 %v751
    %v784 = vunpack.c.l.b16 %v752
    %v785 = vunpack.c.l.b16 %v753
    %v786 = vunpack.c.l.b16 %v754
    %v787 = vunpack.c.l.b16 %v755
    %v788 = vunpack.c.l.b16 %v756
    %v789 = vunpack.c.l.b16 %v757
    %v790 = vunpack.c.l.b16 %v758
    %v791 = vunpack.c.l.b16 %v759
    %v792 = vpack.c.b16 %v777, %v776
    %v793 = vpack.c.b16 %v779, %v778
    %v794 = vpack.c.b16 %v781, %v780
    %v795 = vpack.c.b16 %v783, %v782
    %v796 = vpack.c.b16 %v785, %v784
    %v797 = vpack.c.b16 %v787, %v786
    %v798 = vpack.c.b16 %v789, %v788
    %v799 = vpack.c.b16 %v791, %v790
    %808 = vmatprep.subr.bf16.mxu0 0
    %809 = vmatpush1.bf16.msra.mxu0 %v792
    %810 = vmatprep.subr.bf16.mxu0 0
    %811 = vmatpush1.bf16.msra.mxu0 %v793
    %812 = vmatprep.subr.bf16.mxu0 0
    %813 = vmatpush1.bf16.msra.mxu0 %v794
    %814 = vmatprep.subr.bf16.mxu0 0
    %815 = vmatpush1.bf16.msra.mxu0 %v795
    %816 = vmatprep.subr.bf16.mxu0 0
    %817 = vmatpush1.bf16.msra.mxu0 %v796
    %818 = vmatprep.subr.bf16.mxu0 0
    %819 = vmatpush1.bf16.msra.mxu0 %v797
    %820 = vmatprep.subr.bf16.mxu0 0
    %821 = vmatpush1.bf16.msra.mxu0 %v798
    %822 = vmatprep.subr.bf16.mxu0 0
    %823 = vmatpush1.bf16.msra.mxu0 %v799
    %824 = vmatprep.subr.bf16.mxu0 0
    %825 = vmatpush1.bf16.msra.mxu0 0
    %826 = vmatprep.subr.bf16.mxu0 0
    %827 = vmatpush1.bf16.msra.mxu0 0
    %828 = vmatprep.subr.bf16.mxu0 0
    %829 = vmatpush1.bf16.msra.mxu0 0
    %830 = vmatprep.subr.bf16.mxu0 0
    %831 = vmatpush1.bf16.msra.mxu0 0
    %832 = vmatprep.subr.bf16.mxu0 0
    %833 = vmatpush1.bf16.msra.mxu0 0
    %834 = vmatprep.subr.bf16.mxu0 0
    %835 = vmatpush1.bf16.msra.mxu0 0
    %836 = vmatprep.subr.bf16.mxu0 0
    %837 = vmatpush1.bf16.msra.mxu0 0
    %838 = vmatprep.subr.bf16.mxu0 0
    %839 = vmatpush1.bf16.msra.mxu0 0
    %840 = vmatprep.mubr.bf16.mxu0 0
    %841 = vmatmul.mubr.bf16.gmra.mrb[0].mxu0 %v620
    %v842 = vpop.f32.mrb[0].mxu0
    %v843 = vadd.f32 0.0, %v842
    %v844 = vpop.f32.mrb[0].mxu0
    %v845 = vpop.f32.mrb[0].mxu0
    %v846 = vadd.f32 0.0, %v845
    %v847 = vpop.f32.mrb[0].mxu0
    %848 = vmatprep.mubr.bf16.mxu0 0
    %849 = vmatmul.mubr.bf16.gmra.mrb[0].mxu0 %v621
    %v850 = vpop.f32.mrb[0].mxu0
    %v851 = vadd.f32 0.0, %v850
    %v852 = vpop.f32.mrb[0].mxu0
    %v853 = vpop.f32.mrb[0].mxu0
    %v854 = vadd.f32 0.0, %v853
    %v855 = vpop.f32.mrb[0].mxu0
    %856 = vmatprep.mubr.bf16.mxu0 0
    %857 = vmatmul.mubr.bf16.gmra.mrb[0].mxu0 %v622
    %v858 = vpop.f32.mrb[0].mxu0
    %v859 = vadd.f32 0.0, %v858
    %v860 = vpop.f32.mrb[0].mxu0
    %v861 = vpop.f32.mrb[0].mxu0
    %v862 = vpop.f32.mrb[0].mxu0
    %863 = vdwg.mxu0
    %s864 = scalar_lea.vmem [#allocation5], 128
    %v865 = vld [vmem:[%s864] sm:$0xf]
    %v866 = vld [vmem:[%s864 + $0x4] sm:$0xf]
    %v867 = vld [vmem:[%s864 + $0x8] sm:$0xf]
    %v868 = vld [vmem:[%s864 + $0xc] sm:$0xf]
    %v869 = vld [vmem:[%s864 + $0x10] sm:$0xf]
    %v870 = vld [vmem:[%s864 + $0x14] sm:$0xf]
    %v871 = vld [vmem:[%s864 + $0x18] sm:$0xf]
    %v872 = vld [vmem:[%s864 + $0x1c] sm:$0xf]
    %v873 = vld [vmem:[%s864 + $0x20] sm:$0xf]
    %v874 = vld [vmem:[%s864 + $0x24] sm:$0xf]
    %v875 = vld [vmem:[%s864 + $0x28] sm:$0xf]
    %v876 = vld [vmem:[%s864 + $0x2c] sm:$0xf]
    %v877 = vld [vmem:[%s864 + $0x30] sm:$0xf]
    %v878 = vld [vmem:[%s864 + $0x34] sm:$0xf]
    %v879 = vld [vmem:[%s864 + $0x38] sm:$0xf]
    %v880 = vld [vmem:[%s864 + $0x3c] sm:$0xf]
    %v897 = vunpack.c.l.b16 %v865
    %v898 = vunpack.c.l.b16 %v866
    %v899 = vunpack.c.l.b16 %v867
    %v900 = vunpack.c.l.b16 %v868
    %v901 = vunpack.c.l.b16 %v869
    %v902 = vunpack.c.l.b16 %v870
    %v903 = vunpack.c.l.b16 %v871
    %v904 = vunpack.c.l.b16 %v872
    %v905 = vunpack.c.l.b16 %v873
    %v906 = vunpack.c.l.b16 %v874
    %v907 = vunpack.c.l.b16 %v875
    %v908 = vunpack.c.l.b16 %v876
    %v909 = vunpack.c.l.b16 %v877
    %v910 = vunpack.c.l.b16 %v878
    %v911 = vunpack.c.l.b16 %v879
    %v912 = vunpack.c.l.b16 %v880
    %v913 = vpack.c.b16 %v898, %v897
    %v914 = vpack.c.b16 %v900, %v899
    %v915 = vpack.c.b16 %v902, %v901
    %v916 = vpack.c.b16 %v904, %v903
    %v917 = vpack.c.b16 %v906, %v905
    %v918 = vpack.c.b16 %v908, %v907
    %v919 = vpack.c.b16 %v910, %v909
    %v920 = vpack.c.b16 %v912, %v911
    %929 = vmatprep.subr.bf16.mxu0 0
    %930 = vmatpush1.bf16.msra.mxu0 %v913
    %931 = vmatprep.subr.bf16.mxu0 0
    %932 = vmatpush1.bf16.msra.mxu0 %v914
    %933 = vmatprep.subr.bf16.mxu0 0
    %934 = vmatpush1.bf16.msra.mxu0 %v915
    %935 = vmatprep.subr.bf16.mxu0 0
    %936 = vmatpush1.bf16.msra.mxu0 %v916
    %937 = vmatprep.subr.bf16.mxu0 0
    %938 = vmatpush1.bf16.msra.mxu0 %v917
    %939 = vmatprep.subr.bf16.mxu0 0
    %940 = vmatpush1.bf16.msra.mxu0 %v918
    %941 = vmatprep.subr.bf16.mxu0 0
    %942 = vmatpush1.bf16.msra.mxu0 %v919
    %943 = vmatprep.subr.bf16.mxu0 0
    %944 = vmatpush1.bf16.msra.mxu0 %v920
    %945 = vmatprep.subr.bf16.mxu0 0
    %946 = vmatpush1.bf16.msra.mxu0 0
    %947 = vmatprep.subr.bf16.mxu0 0
    %948 = vmatpush1.bf16.msra.mxu0 0
    %949 = vmatprep.subr.bf16.mxu0 0
    %950 = vmatpush1.bf16.msra.mxu0 0
    %951 = vmatprep.subr.bf16.mxu0 0
    %952 = vmatpush1.bf16.msra.mxu0 0
    %953 = vmatprep.subr.bf16.mxu0 0
    %954 = vmatpush1.bf16.msra.mxu0 0
    %955 = vmatprep.subr.bf16.mxu0 0
    %956 = vmatpush1.bf16.msra.mxu0 0
    %957 = vmatprep.subr.bf16.mxu0 0
    %958 = vmatpush1.bf16.msra.mxu0 0
    %959 = vmatprep.subr.bf16.mxu0 0
    %960 = vmatpush1.bf16.msra.mxu0 0
    %961 = vmatprep.mubr.bf16.mxu0 0
    %962 = vmatmul.mubr.bf16.gmra.mrb[0].mxu0 %v620
    %v963 = vpop.f32.mrb[0].mxu0
    %v964 = vadd.f32 0.0, %v963
    %v965 = vpop.f32.mrb[0].mxu0
    %v966 = vpop.f32.mrb[0].mxu0
    %v967 = vadd.f32 0.0, %v966
    %v968 = vpop.f32.mrb[0].mxu0
    %969 = vmatprep.mubr.bf16.mxu0 0
    %970 = vmatmul.mubr.bf16.gmra.mrb[0].mxu0 %v621
    %v971 = vpop.f32.mrb[0].mxu0
    %v972 = vadd.f32 0.0, %v971
    %v973 = vpop.f32.mrb[0].mxu0
    %v974 = vpop.f32.mrb[0].mxu0
    %v975 = vadd.f32 0.0, %v974
    %v976 = vpop.f32.mrb[0].mxu0
    %977 = vmatprep.mubr.bf16.mxu0 0
    %978 = vmatmul.mubr.bf16.gmra.mrb[0].mxu0 %v622
    %v979 = vpop.f32.mrb[0].mxu0
    %v980 = vadd.f32 0.0, %v979
    %v981 = vpop.f32.mrb[0].mxu0
    %v982 = vpop.f32.mrb[0].mxu0
    %v983 = vpop.f32.mrb[0].mxu0
    %984 = vdwg.mxu0
    %v985 = vrot.slane %v722, 7
    %v986 = vrot.slane %v725, 7
    %v987 = vrot.slane %v730, 7
    %v988 = vrot.slane %v733, 7
    %v989 = vrot.slane %v738, 7
    %v990 = vsel %vm398, %v988, %v989
    %v991 = vsel %vm398, %v987, %v988
    %v992 = vsel %vm398, %v986, %v987
    %v993 = vsel %vm398, %v985, %v986
    %v994 = vsel %vm398, %v989, %v985
    %v995 = vadd.f32 %v994, %v843
    %v996 = vadd.f32 %v993, %v846
    %v997 = vadd.f32 %v992, %v851
    %v998 = vadd.f32 %v991, %v854
    %v999 = vadd.f32 %v990, %v859
    %v1000 = vrot.slane %v964, 1
    %v1001 = vrot.slane %v967, 1
    %v1002 = vrot.slane %v972, 1
    %v1003 = vrot.slane %v975, 1
    %v1004 = vrot.slane %v980, 1
    %v1005 = vsel %vm414, %v1003, %v1004
    %v1006 = vsel %vm414, %v1002, %v1003
    %v1007 = vsel %vm414, %v1001, %v1002
    %v1008 = vsel %vm414, %v1000, %v1001
    %v1009 = vsel %vm414, %v1004, %v1000
    %v1010 = vadd.f32 %v995, %v1008
    %v1011 = vadd.f32 %v996, %v1007
    %v1012 = vadd.f32 %v997, %v1006
    %v1013 = vadd.f32 %v998, %v1005
    %v1014 = vadd.f32 %v999, %v1009
    %v1015 = vmul.f32 %v1010, %v428
    %v1016 = vmul.f32 %v1011, %v433
    %v1017 = vmul.f32 %v1012, %v438
    %v1018 = vmul.f32 %v1013, %v443
    %v1019 = vmul.f32 %v1014, %v448
    %v1020 = vld [vmem:[#allocation8] sm:$0xff]
    %v1021 = vld [vmem:[#allocation8 + $0x8] sm:$0xff]
    %v1022 = vld [vmem:[#allocation8 + $0x10] sm:$0xff]
    %v1023 = vld [vmem:[#allocation8 + $0x18] sm:$0xff]
    %v1024 = vld [vmem:[#allocation8 + $0x20] sm:$0xff]
    %v1025 = vld [vmem:[#allocation8 + $0x28] sm:$0xff]
    %v1026 = vld [vmem:[#allocation8 + $0x30] sm:$0xff]
    %v1027 = vld [vmem:[#allocation8 + $0x38] sm:$0xff]
    %v1028 = vld [vmem:[#allocation8 + $0x40] sm:$0xff]
    %v1029 = vld [vmem:[#allocation8 + $0x48] sm:$0xff]
    %v1030 = vld [vmem:[#allocation8 + $0x50] sm:$0xff]
    %v1031 = vld [vmem:[#allocation8 + $0x58] sm:$0xff]
    %v1032 = vld [vmem:[#allocation8 + $0x60] sm:$0xff]
    %v1033 = vld [vmem:[#allocation8 + $0x68] sm:$0xff]
    %v1034 = vld [vmem:[#allocation8 + $0x70] sm:$0xff]
    %v1035 = vld [vmem:[#allocation8 + $0x78] sm:$0xff]
    %v1036 = vld [vmem:[%s7] sm:$0x1]
    %v1037 = vld [vmem:[%s8] sm:$0x1]
    %v1038 = vadd.f32 %v1015, %v1016
    %v1039 = vadd.f32 %v1038, %v1017
    %v1040 = vadd.f32 %v1039, %v1018
    %v1041 = vadd.f32 %v1040, %v1019
    %v1042 = vrot.slane %v1041, 4
    %v1043 = vadd.f32 %v1041, %v1042
    %v1044 = vrot.slane %v1043, 2
    %v1045 = vadd.f32 %v1043, %v1044
    %v1046 = vrot.slane %v1045, 1
    %v1047 = vadd.f32 %v1045, %v1046
    %v1048 = vmul.f32 %v1015, %v1015
    %v1049 = vmul.f32 %v1016, %v1016
    %v1050 = vmul.f32 %v1017, %v1017
    %v1051 = vmul.f32 %v1018, %v1018
    %v1052 = vmul.f32 %v1019, %v1019
    %v1053 = vadd.f32 %v1048, %v1049
    %v1054 = vadd.f32 %v1053, %v1050
    %v1055 = vadd.f32 %v1054, %v1051
    %v1056 = vadd.f32 %v1055, %v1052
    %v1057 = vrot.slane %v1056, 4
    %v1058 = vadd.f32 %v1056, %v1057
    %v1059 = vrot.slane %v1058, 2
    %v1060 = vadd.f32 %v1058, %v1059
    %v1061 = vrot.slane %v1060, 1
    %v1062 = vadd.f32 %v1060, %v1061
    %v1063 = vsel %vm498, %v1047, %v1062
    %1064 = vmatprep.subr.mxu0 0.0
    %1065 = vmatpush1.msra.mxu0 %v1020
    %1066 = vmatprep.subr.mxu0 0.0
    %1067 = vmatpush1.msra.mxu0 %v1021
    %1068 = vmatprep.subr.mxu0 0.0
    %1069 = vmatpush1.msra.mxu0 %v1022
    %1070 = vmatprep.subr.mxu0 0.0
    %1071 = vmatpush1.msra.mxu0 %v1023
    %1072 = vmatprep.subr.mxu0 0.0
    %1073 = vmatpush1.msra.mxu0 %v1024
    %1074 = vmatprep.subr.mxu0 0.0
    %1075 = vmatpush1.msra.mxu0 %v1025
    %1076 = vmatprep.subr.mxu0 0.0
    %1077 = vmatpush1.msra.mxu0 %v1026
    %1078 = vmatprep.subr.mxu0 0.0
    %1079 = vmatpush1.msra.mxu0 %v1027
    %1080 = vmatprep.subr.mxu0 0.0
    %1081 = vmatpush1.msra.mxu0 %v1028
    %1082 = vmatprep.subr.mxu0 0.0
    %1083 = vmatpush1.msra.mxu0 %v1029
    %1084 = vmatprep.subr.mxu0 0.0
    %1085 = vmatpush1.msra.mxu0 %v1030
    %1086 = vmatprep.subr.mxu0 0.0
    %1087 = vmatpush1.msra.mxu0 %v1031
    %1088 = vmatprep.subr.mxu0 0.0
    %1089 = vmatpush1.msra.mxu0 %v1032
    %1090 = vmatprep.subr.mxu0 0.0
    %1091 = vmatpush1.msra.mxu0 %v1033
    %1092 = vmatprep.subr.mxu0 0.0
    %1093 = vmatpush1.msra.mxu0 %v1034
    %1094 = vmatprep.subr.mxu0 0.0
    %1095 = vmatpush1.msra.mxu0 %v1035
    %1096 = vmatprep.subr.mxu0 0.0
    %1097 = vmatpush1.msra.mxu0 0.0
    %1098 = vmatprep.subr.mxu0 0.0
    %1099 = vmatpush1.msra.mxu0 0.0
    %1100 = vmatprep.subr.mxu0 0.0
    %1101 = vmatpush1.msra.mxu0 0.0
    %1102 = vmatprep.subr.mxu0 0.0
    %1103 = vmatpush1.msra.mxu0 0.0
    %1104 = vmatprep.subr.mxu0 0.0
    %1105 = vmatpush1.msra.mxu0 0.0
    %1106 = vmatprep.subr.mxu0 0.0
    %1107 = vmatpush1.msra.mxu0 0.0
    %1108 = vmatprep.subr.mxu0 0.0
    %1109 = vmatpush1.msra.mxu0 0.0
    %1110 = vmatprep.subr.mxu0 0.0
    %1111 = vmatpush1.msra.mxu0 0.0
    %1112 = vmatprep.subr.mxu0 0.0
    %1113 = vmatpush1.msra.mxu0 0.0
    %1114 = vmatprep.subr.mxu0 0.0
    %1115 = vmatpush1.msra.mxu0 0.0
    %1116 = vmatprep.subr.mxu0 0.0
    %1117 = vmatpush1.msra.mxu0 0.0
    %1118 = vmatprep.subr.mxu0 0.0
    %1119 = vmatpush1.msra.mxu0 0.0
    %1120 = vmatprep.subr.mxu0 0.0
    %1121 = vmatpush1.msra.mxu0 0.0
    %1122 = vmatprep.subr.mxu0 0.0
    %1123 = vmatpush1.msra.mxu0 0.0
    %1124 = vmatprep.subr.mxu0 0.0
    %1125 = vmatpush1.msra.mxu0 0.0
    %1126 = vmatprep.subr.mxu0 0.0
    %1127 = vmatpush1.msra.mxu0 0.0
    %1128 = vmatprep.mubr.f32.mxu0 0.0
    %1129 = vmatmul.mubr.f32.gmra.mrb[0].mxu0 %v1063
    %v1130 = vpop.f32.mrb[0].mxu0
    %v1131 = vadd.f32 0.0, %v1130
    %v1132 = vpop.f32.mrb[0].mxu0
    %1133 = vdwg.mxu0
    %v1134 = vmul.f32 %v1131, %v1131
    %v1136 = vrot.slane %v1134, 7
    %v1138 = vsub.f32 %v1131, %v1136
    %v1139 = vmax.f32 %v1138, 0.0
    %v1140 = vadd.f32 %v1139, 1e-05
    %v1141 = vrsqrt.pop %v1140
    %v1143 = vlaneseq
    %v1144 = vshrl.u32 %v1143, 7
    %v1145 = vsub.s32 0, %v1144
    %v1146 = vrot.slane %v1036, %v1145
    %v1148 = vmul.f32 %v1141, %v1146
    %v1150 = vrot.slane %v1148, 1
    %v1152 = vmul.f32 %v1131, %v1150
    %v1153 = vsub.f32 %v1037, %v1152
    %v1154 = vlaneseq
    %v1155 = vshrl.u32 %v1154, 7
    %v1156 = vsub.s32 1, %v1155
    %v1157 = vrot.slane %v1148, %v1156
    %v1158 = vmul.f32 %v1015, %v1157
    %v1159 = vmul.f32 %v1016, %v1157
    %v1160 = vmul.f32 %v1017, %v1157
    %v1161 = vmul.f32 %v1018, %v1157
    %v1162 = vmul.f32 %v1019, %v1157
    %v1164 = vlaneseq
    %v1165 = vshrl.u32 %v1164, 7
    %v1166 = vsub.s32 0, %v1165
    %v1167 = vrot.slane %v1153, %v1166
    %v1169 = vadd.f32 %v1158, %v1167
    %v1170 = vadd.f32 %v1159, %v1167
    %v1171 = vadd.f32 %v1160, %v1167
    %v1172 = vadd.f32 %v1161, %v1167
    %v1173 = vadd.f32 %v1162, %v1167
    %v1174 = vmax.f32 %v1169, 0.0
    %v1175 = vmax.f32 %v1170, 0.0
    %v1176 = vmax.f32 %v1171, 0.0
    %v1177 = vmax.f32 %v1172, 0.0
    %v1178 = vmax.f32 %v1173, 0.0
    %v1179 = vmul.f32 %v1174, %v428
    %v1180 = vmul.f32 %v1175, %v433
    %v1181 = vmul.f32 %v1176, %v438
    %v1182 = vmul.f32 %v1177, %v443
    %v1183 = vmul.f32 %v1178, %v448
    %1184 = vst [vmem:[#allocation10] sm:$0xff] %v1179
    %1185 = vst [vmem:[#allocation10 + $0x8] sm:$0xff] %v1180
    %1186 = vst [vmem:[#allocation10 + $0x10] sm:$0xff] %v1181
    %1187 = vst [vmem:[#allocation10 + $0x18] sm:$0xff] %v1182
    %1188 = vst [vmem:[#allocation10 + $0x20] sm:$0xff] %v1183
    // Predicated region
    $region58: #{tpu_custom_call.1} parent=1 // pred_check
      _
    $region59: #{tpu_custom_call.1} parent=1 // pred_check_branch
      %1190 = sbr.rel (0) target = $region61
    $region60: #{tpu_custom_call.1} parent=1 // pred_region
      %s1192 = ssub.s32 640, 640
      %1193 = vsyncadd [#allocation4], %s1192
      %s1194 = sshll.u32 [#allocation10], 4
      %s1195 = int_to_ptr.vmem [resolvable:$true] %s1194
      %1200 = dma.vmem_to_hbm [thread:$0]  %s1195, 640, %s10, [#allocation4], 128, 128, 8
    $region61: #{tpu_custom_call.1} parent=1 // pred_fallthru
      _
    // Predicated region
    $region62: #{tpu_custom_call.1} parent=1 // pred_check
      _
    $region63: #{tpu_custom_call.1} parent=1 // pred_check_branch
      %1202 = sbr.rel (0) target = $region65
    $region64: #{tpu_custom_call.1} parent=1 // pred_region
      %1203 = dma.done [#allocation4], 640
    $region65: #{tpu_custom_call.1} parent=1 // pred_fallthru
      _
    %1204 = vsyncpa [#allocation3], 1
    %1205 = vsyncpa [#allocation6], 1
    %1206 = vsyncpa [#allocation9], 1
    %1207 = vsyncpa [#allocation4], 1

</llo_original>
